<compile_context>
chip_gen: v6e
topology: v6e:2x2x1
jax: 0.10.0
libtpu: 0.0.40
codegen_flags: <defaults>
</compile_context>

<pallas_src>
import jax
import jax.numpy as jnp
from jax import lax
from jax.experimental import pallas as pl
from jax.experimental.pallas import tpu as pltpu


# ----------------------------------------------------------------------------
# Kernel 1: pairwise squared distances for knn_points
# (kept at f32 HIGHEST: neighbor ordering is precision sensitive)
# ----------------------------------------------------------------------------
def _pdist_kernel(new_xyz_ref, xyz_t_ref, out_ref):
    a = new_xyz_ref[0]                                          # (M, 3)
    bt = xyz_t_ref[0]                                           # (3, N)
    aa = jnp.sum(a * a, axis=1, keepdims=True)                  # (M, 1)
    bb = jnp.sum(bt * bt, axis=0, keepdims=True)                # (1, N)
    ab = jnp.dot(a, bt, preferred_element_type=jnp.float32,
                 precision=lax.Precision.HIGHEST)               # (M, N)
    out_ref[0] = aa - 2.0 * ab + bb


def pairwise_sqdist(new_xyz, xyz):
    B, M, _ = new_xyz.shape
    N = xyz.shape[1]
    xyz_t = jnp.transpose(xyz, (0, 2, 1))                       # (B, 3, N) (tiny)
    return pl.pallas_call(
        _pdist_kernel,
        out_shape=jax.ShapeDtypeStruct((B, M, N), jnp.float32),
        grid=(B,),
        in_specs=[
            pl.BlockSpec((1, M, 3), lambda b: (b, 0, 0)),
            pl.BlockSpec((1, 3, N), lambda b: (b, 0, 0)),
        ],
        out_specs=pl.BlockSpec((1, M, N), lambda b: (b, 0, 0)),
        compiler_params=pltpu.CompilerParams(dimension_semantics=("parallel",)),
    )(new_xyz, xyz_t)


# ----------------------------------------------------------------------------
# Kernel 2: fused pre_shared_mlp + KNN gather + shared_mlp + max over K
# ----------------------------------------------------------------------------
def _edge_aggr_kernel(idx_ref, feat_ref, xyz_ref, nxyz_ref,
                      pw1_ref, pb1_ref, pw2_ref, pb2_ref,
                      w1x_ref, w1c_ref, w1f_ref, b1_ref, w2_ref, b2_ref,
                      out_ref):
    # ---- pre_shared_mlp: conv1d(C0->C1)+BN+ReLU, conv1d(C1->C2) --------------
    # feat arrives in PyTorch (C0, N) layout; transpose in-kernel (XLU, cheap).
    x = feat_ref[0].T                                            # (N, C0)
    h = jnp.maximum(
        jnp.dot(x, pw1_ref[...], preferred_element_type=jnp.float32)
        + pb1_ref[...], 0.0)                                     # (N, C1)
    h = (jnp.dot(h, pw2_ref[...], preferred_element_type=jnp.float32)
         + pb2_ref[...])                                         # (N, C2)

    xyz = xyz_ref[0]                                             # (N, 3)
    ctr = nxyz_ref[0]                                            # (M, 3)  new_xyz
    idx = idx_ref[0]                                             # (M, K) int32
    M, K = idx.shape
    N = xyz.shape[0]
    H2 = w2_ref.shape[1]
    w2 = w2_ref[...]
    b2 = b2_ref[...]

    # ---- shared_mlp layer-1, gather fused into the matmul --------------------
    #   edge_k = [knn_xyz_k - ctr, ctr, knn_feat_k]
    #   edge_k @ W1 + b1 = onehot_k @ (xyz @ W1_xyz + h @ W1_feat)
    #                      + ctr @ (W1[3:6] - W1[:3]) + b1
    tw = (jnp.dot(xyz, w1x_ref[...], preferred_element_type=jnp.float32)
          + jnp.dot(h, w1f_ref[...], preferred_element_type=jnp.float32))   # (N, H1)
    base = (jnp.dot(ctr, w1c_ref[...], preferred_element_type=jnp.float32)
            + b1_ref[...])                                                  # (M, H1)

    col = lax.broadcasted_iota(jnp.int32, (M, N), 1)
    acc = jnp.full((M, H2), -jnp.inf, dtype=jnp.float32)
    for k in range(K):                     # K is small and static -> unrolled
        onehot = (idx[:, k:k + 1] == col).astype(jnp.float32)               # (M, N)
        h1 = jnp.maximum(
            jnp.dot(onehot, tw, preferred_element_type=jnp.float32) + base, 0.0)
        hk = jnp.maximum(
            jnp.dot(h1, w2, preferred_element_type=jnp.float32) + b2, 0.0)  # (M, H2)
        acc = jnp.maximum(acc, hk)         # max over neighbors

    out_ref[0] = acc.T                     # (H2, M): M lane-dense, PyTorch layout


def edge_aggr_fused(idx, feat, xyz, new_xyz, params):
    B, C0, N = feat.shape
    _, M, K = idx.shape
    pre_w1, pre_b1 = params["pre_w1"], params["pre_b1"]
    pre_w2, pre_b2 = params["pre_w2"], params["pre_b2"]
    w1, b1 = params["mlp_w1"], params["mlp_b1"]
    w2, b2 = params["mlp_w2"], params["mlp_b2"]
    C1, C2 = pre_w1.shape[1], pre_w2.shape[1]
    H1, H2 = w1.shape[1], w2.shape[1]

    # Split shared_mlp layer-1 weights (tiny, done once in XLA) so the kernel
    # never materializes / concatenates the edge tensor.
    w1_xyz = w1[0:3]                 # (3, H1)  -> multiplies knn_xyz
    w1_ctr = w1[3:6] - w1[0:3]       # (3, H1)  -> multiplies tiled center xyz
    w1_feat = w1[6:]                 # (C2, H1) -> multiplies knn_feat

    return pl.pallas_call(
        _edge_aggr_kernel,
        out_shape=jax.ShapeDtypeStruct((B, H2, M), jnp.float32),
        grid=(B,),
        in_specs=[
            pl.BlockSpec((1, M, K), lambda b: (b, 0, 0)),     # knn idx
            pl.BlockSpec((1, C0, N), lambda b: (b, 0, 0)),    # feat (PyTorch NCW)
            pl.BlockSpec((1, N, 3), lambda b: (b, 0, 0)),     # xyz
            pl.BlockSpec((1, M, 3), lambda b: (b, 0, 0)),     # new_xyz
            pl.BlockSpec((C0, C1), lambda b: (0, 0)),
            pl.BlockSpec((1, C1), lambda b: (0, 0)),
            pl.BlockSpec((C1, C2), lambda b: (0, 0)),
            pl.BlockSpec((1, C2), lambda b: (0, 0)),
            pl.BlockSpec((3, H1), lambda b: (0, 0)),
            pl.BlockSpec((3, H1), lambda b: (0, 0)),
            pl.BlockSpec((C2, H1), lambda b: (0, 0)),
            pl.BlockSpec((1, H1), lambda b: (0, 0)),
            pl.BlockSpec((H1, H2), lambda b: (0, 0)),
            pl.BlockSpec((1, H2), lambda b: (0, 0)),
        ],
        out_specs=pl.BlockSpec((1, H2, M), lambda b: (b, 0, 0)),
        compiler_params=pltpu.CompilerParams(dimension_semantics=("parallel",)),
    )(idx, feat, xyz, new_xyz,
      pre_w1, pre_b1, pre_w2, pre_b2,
      w1_xyz, w1_ctr, w1_feat, b1, w2, b2)


# ----------------------------------------------------------------------------
# Full forward
# ----------------------------------------------------------------------------
def edge_aggr_forward(new_xyz, xyz, feat, params, k):
    dist = pairwise_sqdist(new_xyz, xyz)                        # (B, M, N)
    # TODO(synk): top_k / sort has no Pallas TPU lowering; neighbor selection
    # stays in XLA between the two Pallas kernels.
    _, idx = lax.top_k(-dist, k)                                # (B, M, k)
    return edge_aggr_fused(idx, feat, xyz, new_xyz, params)     # (B, H2, M)


# ----------------------------------------------------------------------------
# Pure-JAX reference (for correctness check)
# ----------------------------------------------------------------------------
def reference(new_xyz, xyz, feat, params, k):
    B, M, _ = new_xyz.shape
    x = jnp.transpose(feat, (0, 2, 1))
    h = jnp.maximum(x @ params["pre_w1"] + params["pre_b1"], 0.0)
    h = h @ params["pre_w2"] + params["pre_b2"]
    d = jnp.sum((new_xyz[:, :, None, :] - xyz[:, None, :, :]) ** 2, axis=-1)
    _, idx = lax.top_k(-d, k)
    knn_xyz = jnp.take_along_axis(xyz[:, None], idx[..., None], axis=2)
    knn_feat = jnp.take_along_axis(h[:, None], idx[..., None], axis=2)
    xyz_tiled = jnp.broadcast_to(new_xyz[:, :, None, :], (B, M, k, 3))
    edge = jnp.concatenate([knn_xyz - xyz_tiled, xyz_tiled, knn_feat], axis=-1)
    e = jnp.maximum(edge @ params["mlp_w1"] + params["mlp_b1"], 0.0)
    e = jnp.maximum(e @ params["mlp_w2"] + params["mlp_b2"], 0.0)
    return jnp.transpose(jnp.max(e, axis=2), (0, 2, 1))


# ----------------------------------------------------------------------------
# Deterministic parameter init (eval-mode BatchNorm folded into W, b)
# ----------------------------------------------------------------------------
def fold_bn(w, b, gamma, beta, mean, var, eps=1e-5):
    scale = gamma / jnp.sqrt(var + eps)
    return w * scale[None, :], (b - mean) * scale + beta


def make_params(key, C0, C1, C2, H1, H2):
    ks = jax.random.split(key, 16)
    Cin = C2 + 6                     # cfg.use_xyz -> mlps[0] += 6

    def bn(k, c):
        k1, k2, k3, k4 = jax.random.split(k, 4)
        gamma = jax.random.uniform(k1, (c,), jnp.float32, 0.5, 1.5)
        beta = 0.1 * jax.random.normal(k2, (c,), jnp.float32)
        mean = 0.1 * jax.random.normal(k3, (c,), jnp.float32)
        var = jax.random.uniform(k4, (c,), jnp.float32, 0.5, 1.5)
        return gamma, beta, mean, var

    # pre_shared_mlp layer 1: conv1d(C0->C1) (no bias because bn) + BN + ReLU
    w, b = fold_bn(0.2 * jax.random.normal(ks[0], (C0, C1), jnp.float32),
                   jnp.zeros((C1,), jnp.float32), *bn(ks[1], C1))
    pre_w1, pre_b1 = w, b.reshape(1, C1)
    # pre_shared_mlp layer 2: conv1d(C1->C2), bias, no BN, no activation
    pre_w2 = 0.2 * jax.random.normal(ks[2], (C1, C2), jnp.float32)
    pre_b2 = (0.1 * jax.random.normal(ks[3], (C2,), jnp.float32)).reshape(1, C2)
    # shared_mlp layer 1: conv2d(Cin->H1) + BN + ReLU
    w, b = fold_bn(0.2 * jax.random.normal(ks[4], (Cin, H1), jnp.float32),
                   jnp.zeros((H1,), jnp.float32), *bn(ks[5], H1))
    mlp_w1, mlp_b1 = w, b.reshape(1, H1)
    # shared_mlp layer 2: conv2d(H1->H2) + BN + ReLU
    w, b = fold_bn(0.2 * jax.random.normal(ks[6], (H1, H2), jnp.float32),
                   jnp.zeros((H2,), jnp.float32), *bn(ks[7], H2))
    mlp_w2, mlp_b2 = w, b.reshape(1, H2)

    return dict(pre_w1=pre_w1, pre_b1=pre_b1, pre_w2=pre_w2, pre_b2=pre_b2,
                mlp_w1=mlp_w1, mlp_b1=mlp_b1, mlp_w2=mlp_w2, mlp_b2=mlp_b2)


if __name__ == "__main__":
    B, N, M, K = 2, 64, 16, 8                 # K == cfg.nsample
    C0, C1, C2 = 8, 16, 16                    # cfg.pre_mlps = [8, 16, 16]
    H1, H2 = 32, 32                           # cfg.mlps = [16(+6), 32, 32]

    key = jax.random.PRNGKey(0)
    k_xyz, k_new, k_feat, k_par = jax.random.split(key, 4)
    xyz = jax.random.uniform(k_xyz, (B, N, 3), jnp.float32)
    new_xyz = jax.random.uniform(k_new, (B, M, 3), jnp.float32)
    feat = jax.random.normal(k_feat, (B, C0, N), jnp.float32)   # PyTorch (B, C, N)
    params = make_params(k_par, C0, C1, C2, H1, H2)

    out = edge_aggr_forward(new_xyz, xyz, feat, params, K)
    out = jax.block_until_ready(out)
    assert out.shape == (B, H2, M), out.shape

    ref = jax.block_until_ready(reference(new_xyz, xyz, feat, params, K))
    # MLP matmuls now run at default (bf16-input) MXU precision per the perf
    # guidance, so compare at bf16-level tolerance.
    assert jnp.allclose(out, ref, rtol=2e-2, atol=2e-2), \
        float(jnp.max(jnp.abs(out - ref)))

    print("KERNEL_OK")
</pallas_src>

<mosaic_0001>
module attributes {stable_mosaic.version = 11 : i64} {
  func.func @_pdist_kernel(%arg0: i32, %arg1: memref<1x16x3xf32, #tpu.memory_space<vmem>>, %arg2: memref<1x3x64xf32, #tpu.memory_space<vmem>>, %arg3: memref<1x16x64xf32, #tpu.memory_space<vmem>>) attributes {dimension_semantics = [#tpu.dimension_semantics<parallel>], iteration_bounds = array<i64: 2>, scalar_prefetch = 0 : i64, scratch_operands = 0 : i64, tpu.core_type = #tpu.core_type<tc>, window_params = [{transform_indices = @transform_0, window_bounds = array<i64: 1, 16, 3>}, {transform_indices = @transform_1, window_bounds = array<i64: 1, 3, 64>}, {transform_indices = @transform_2, window_bounds = array<i64: 1, 16, 64>}]} {
    %c0 = arith.constant 0 : index
    %c0_0 = arith.constant 0 : index
    %c0_1 = arith.constant 0 : index
    %0 = vector.load %arg1[%c0, %c0_0, %c0_1] : memref<1x16x3xf32, #tpu.memory_space<vmem>>, vector<1x16x3xf32>
    %1 = vector.shape_cast %0 : vector<1x16x3xf32> to vector<16x3xf32>
    %c0_2 = arith.constant 0 : index
    %c0_3 = arith.constant 0 : index
    %c0_4 = arith.constant 0 : index
    %2 = vector.load %arg2[%c0_2, %c0_3, %c0_4] : memref<1x3x64xf32, #tpu.memory_space<vmem>>, vector<1x3x64xf32>
    %3 = vector.shape_cast %2 : vector<1x3x64xf32> to vector<3x64xf32>
    %4 = arith.mulf %1, %1 : vector<16x3xf32>
    %cst = arith.constant dense<0.000000e+00> : vector<16xf32>
    %5 = vector.multi_reduction <add>, %4, %cst [1] : vector<16x3xf32> to vector<16xf32>
    %6 = vector.shape_cast %5 : vector<16xf32> to vector<16x1xf32>
    %7 = arith.mulf %3, %3 : vector<3x64xf32>
    %cst_5 = arith.constant dense<0.000000e+00> : vector<64xf32>
    %8 = vector.multi_reduction <add>, %7, %cst_5 [0] : vector<3x64xf32> to vector<64xf32>
    %9 = vector.shape_cast %8 : vector<64xf32> to vector<1x64xf32>
    %cst_6 = arith.constant dense<0.000000e+00> : vector<16x64xf32>
    %10 = tpu.matmul %1, %3, %cst_6 {dimension_numbers = #tpu.dot_dimension_numbers<[1], [0], [0], [1], [0, 0, 1, 1], [], []>, precision = #tpu.contract_precision<fp32>} : vector<16x3xf32>, vector<3x64xf32>, vector<16x64xf32> -> vector<16x64xf32>
    %cst_7 = arith.constant 2.000000e+00 : f32
    %11 = vector.broadcast %cst_7 : f32 to vector<16x64xf32>
    %12 = arith.mulf %11, %10 : vector<16x64xf32>
    %13 = vector.broadcast %6 : vector<16x1xf32> to vector<16x64xf32>
    %14 = arith.subf %13, %12 : vector<16x64xf32>
    %15 = vector.broadcast %9 : vector<1x64xf32> to vector<16x64xf32>
    %16 = arith.addf %14, %15 : vector<16x64xf32>
    %c0_8 = arith.constant 0 : index
    %c0_9 = arith.constant 0 : index
    %c0_10 = arith.constant 0 : index
    %17 = vector.load %arg3[%c0_8, %c0_9, %c0_10] : memref<1x16x64xf32, #tpu.memory_space<vmem>>, vector<1x16x64xf32>
    %18 = vector.shape_cast %17 : vector<1x16x64xf32> to vector<16x64xf32>
    %19 = vector.shape_cast %16 : vector<16x64xf32> to vector<1x16x64xf32>
    tpu.vector_store %arg3[%c0_8, %c0_9, %c0_10], %19 {strides = array<i32>} : memref<1x16x64xf32, #tpu.memory_space<vmem>>, vector<1x16x64xf32>,
    return
  }
  func.func @transform_0(%arg0: i32) -> (i32, i32, i32) {
    %c0_i32 = arith.constant 0 : i32
    %c0_i32_0 = arith.constant 0 : i32
    %c0_i32_1 = arith.constant 0 : i32
    return %arg0, %c0_i32, %c0_i32_0 : i32, i32, i32
  }
  func.func @transform_1(%arg0: i32) -> (i32, i32, i32) {
    %c0_i32 = arith.constant 0 : i32
    %c0_i32_0 = arith.constant 0 : i32
    %c0_i32_1 = arith.constant 0 : i32
    return %arg0, %c0_i32, %c0_i32_0 : i32, i32, i32
  }
  func.func @transform_2(%arg0: i32) -> (i32, i32, i32) {
    %c0_i32 = arith.constant 0 : i32
    %c0_i32_0 = arith.constant 0 : i32
    %c0_i32_1 = arith.constant 0 : i32
    return %arg0, %c0_i32, %c0_i32_0 : i32, i32, i32
  }
}

</mosaic_0001>

<llo_original>
// kernel: tpu_custom_call.1
$region0: #{tpu_custom_call.1}
  #allocation0 [shape = 'u32[]', space=smem, size = 0x4, offset = 0x4, fixed_abs, tag = 'smem constant byte address 0x4 - core index']
  #allocation1 [shape = 'u32[144,128]{1,0:T(1,128)}', space=vmem, size = 0x12000, scoped, tag = 'internal scratch']
  %s0 = inlined_call_operand.vmem [shape: f32[2,16,3], index: 0, kind: input, shape index: {}]
  %s1 = inlined_call_operand.vmem [shape: f32[2,3,64], index: 1, kind: input, shape index: {}]
  %s2 = inlined_call_operand.hbm [shape: f32[2,16,64], index: 2, kind: output, shape index: {}]
  %s3 = sld [smem:[#allocation0]]
  $region41: #{tpu_custom_call.1} parent=0
    _
  %s5 = ssub.s32 1, %s3
  %s6 = scalar_select 0, %s5, %s3
  $region1: #{tpu_custom_call.1} parent=0
    #allocation2 [shape = 'u8[16384]{0}', space=vmem, size = 0x4000, scoped, tag = 'output window, operand 0']
    #allocation3 [shape = 's32[2]{0}', space=sflag, size = 0x8, scoped, tag = 'scoped memory for tpu_custom_call.1']
    %7 = vsyncpa [#allocation3], 0
    %s8 = scalar_lea.sflag [#allocation3], 1
    %9 = vsyncpa %s8, 0
    loop: start=0, step=1, limit=4
    $region2: #{tpu_custom_call.1} parent=1 // loop_pre_header
      _
    $region3: #{tpu_custom_call.1} parent=1 // loop_header
      %s11 = sphi 0, %s15
      %p12 = scmp.ge.s32.totalorder %s11, 4
      %s21 = sphi 0, %s23
      %s24 = sphi 0, %s21
      %s25 = sphi 0, %s24
      %s41 = sphi 0, %s25
      %s47 = sphi 0, %s49
      %s50 = sphi 0, %s47
      %s51 = sphi 0, %s50
      %s67 = sphi 0, %s51
      %s73 = sphi 0, %s75
      %s76 = sphi 0, %s73
      %s77 = sphi 0, %s76
      %s93 = sphi 0, %s77
    $region4: #{tpu_custom_call.1} parent=1 // loop_header_branch
      %14 = sbr.rel (%p12) target = $region8
    $region5: #{tpu_custom_call.1} parent=1 // loop_body
      %s16 = ssub.s32 %s11, 1
      %s17 = ssub.s32 %s11, 2
      %s18 = sadd.s32 %s11, 1
      %s19 = ssub.s32 %s11, %s18
      %p20 = scmp.eq.s32.totalorder %s19, 0
      %s22 = sadd.s32 %s21, 1
      %s23 = scalar_select %p20, %s21, %s22
      %p26 = pneg %p20
      %p27 = scmp.eq.s32.totalorder %s11, 1
      %p28 = por %p26, %p27
      %p29 = scmp.ne.s32.totalorder %s21, %s24
      %p30 = scmp.eq.s32.totalorder %s11, 0
      %p31 = por %p29, %p30
      %p32 = scmp.ne.s32.totalorder %s21, %s24
      %p33 = scmp.eq.s32.totalorder %s16, 1
      %p34 = por %p32, %p33
      %p35 = scmp.ne.s32.totalorder %s24, %s25
      %p36 = scmp.eq.s32.totalorder %s16, 0
      %p37 = por %p35, %p36
      %p38 = scmp.ne.s32.totalorder %s24, %s25
      %p39 = scmp.eq.s32.totalorder %s17, 1
      %p40 = por %p38, %p39
      %p42 = scmp.ne.s32.totalorder %s25, %s41
      %p43 = scmp.eq.s32.totalorder %s17, 0
      %p44 = por %p42, %p43
      %s45 = ssub.s32 %s11, %s18
      %p46 = scmp.eq.s32.totalorder %s45, 0
      %s48 = sadd.s32 %s47, 1
      %s49 = scalar_select %p46, %s47, %s48
      %p52 = pneg %p46
      %p53 = scmp.eq.s32.totalorder %s11, 1
      %p54 = por %p52, %p53
      %p55 = scmp.ne.s32.totalorder %s47, %s50
      %p56 = scmp.eq.s32.totalorder %s11, 0
      %p57 = por %p55, %p56
      %p58 = scmp.ne.s32.totalorder %s47, %s50
      %p59 = scmp.eq.s32.totalorder %s16, 1
      %p60 = por %p58, %p59
      %p61 = scmp.ne.s32.totalorder %s50, %s51
      %p62 = scmp.eq.s32.totalorder %s16, 0
      %p63 = por %p61, %p62
      %p64 = scmp.ne.s32.totalorder %s50, %s51
      %p65 = scmp.eq.s32.totalorder %s17, 1
      %p66 = por %p64, %p65
      %p68 = scmp.ne.s32.totalorder %s51, %s67
      %p69 = scmp.eq.s32.totalorder %s17, 0
      %p70 = por %p68, %p69
      %s71 = ssub.s32 %s11, %s18
      %p72 = scmp.eq.s32.totalorder %s71, 0
      %s74 = sadd.s32 %s73, 1
      %s75 = scalar_select %p72, %s73, %s74
      %p78 = pneg %p72
      %p79 = scmp.eq.s32.totalorder %s11, 1
      %p80 = por %p78, %p79
      %p81 = scmp.ne.s32.totalorder %s73, %s76
      %p82 = scmp.eq.s32.totalorder %s11, 0
      %p83 = por %p81, %p82
      %p84 = scmp.ne.s32.totalorder %s73, %s76
      %p85 = scmp.eq.s32.totalorder %s16, 1
      %p86 = por %p84, %p85
      %p87 = scmp.ne.s32.totalorder %s76, %s77
      %p88 = scmp.eq.s32.totalorder %s16, 0
      %p89 = por %p87, %p88
      %p90 = scmp.ne.s32.totalorder %s76, %s77
      %p91 = scmp.eq.s32.totalorder %s17, 1
      %p92 = por %p90, %p91
      %p94 = scmp.ne.s32.totalorder %s77, %s93
      %p95 = scmp.eq.s32.totalorder %s17, 0
      %p96 = por %p94, %p95
      %p97 = scmp.le.s32.totalorder 1, %s11
      %p98 = scmp.lt.s32.totalorder %s11, 3
      %p99 = pnand %p97, %p98
      %p100 = pneg %p99
      // Predicated region
      $region9: #{tpu_custom_call.1} parent=5 // pred_check
        _
      $region10: #{tpu_custom_call.1} parent=5 // pred_check_branch
        %102 = sbr.rel (%p99) target = $region12
      $region11: #{tpu_custom_call.1} parent=5 // pred_region
        %s103 = ssub.s32 %s11, 1
      $region12: #{tpu_custom_call.1} parent=5 // pred_fallthru
        _
      %p104 = scmp.lt.s32.totalorder %s11, 2
      // Predicated region
      $region13: #{tpu_custom_call.1} parent=5 // pred_check
        %p105 = pneg %p104
      $region14: #{tpu_custom_call.1} parent=5 // pred_check_branch
        %107 = sbr.rel (%p105) target = $region16
      $region15: #{tpu_custom_call.1} parent=5 // pred_region
        // Predicated region
        $region17: #{tpu_custom_call.1} parent=15 // pred_check
          %p108 = pneg %p31
        $region18: #{tpu_custom_call.1} parent=15 // pred_check_branch
          %110 = sbr.rel (%p108) target = $region20
        $region19: #{tpu_custom_call.1} parent=15 // pred_region
          %p111 = scmp.lt.s32.totalorder %s11, 1
          %s112 = scalar_select %p111, %s11, 1
          %s113 = smul.addr %s112, 2
          %s114 = smul.addr %s113, 8
          %s115 = scalar_lea.vmem %s0, %s114
        $region20: #{tpu_custom_call.1} parent=15 // pred_fallthru
          _
        // Predicated region
        $region21: #{tpu_custom_call.1} parent=15 // pred_check
          %p116 = pneg %p57
        $region22: #{tpu_custom_call.1} parent=15 // pred_check_branch
          %118 = sbr.rel (%p116) target = $region24
        $region23: #{tpu_custom_call.1} parent=15 // pred_region
          %p119 = scmp.lt.s32.totalorder %s11, 1
          %s120 = scalar_select %p119, %s11, 1
          %s121 = smul.addr %s120, 4
          %s122 = scalar_lea.vmem %s1, %s121
        $region24: #{tpu_custom_call.1} parent=15 // pred_fallthru
          _
      $region16: #{tpu_custom_call.1} parent=5 // pred_fallthru
        _
      %p123 = scmp.le.s32.totalorder 1, %s11
      %p124 = scmp.lt.s32.totalorder %s11, 3
      %p125 = pnand %p123, %p124
      %p126 = pneg %p125
      // Predicated region
      $region25: #{tpu_custom_call.1} parent=5 // pred_check
        _
      $region26: #{tpu_custom_call.1} parent=5 // pred_check_branch
        %128 = sbr.rel (%p125) target = $region28
      $region27: #{tpu_custom_call.1} parent=5 // pred_region
        %s129 = ssub.s32 %s11, 1
        %p130 = scmp.lt.s32.totalorder %s16, 1
        %s131 = scalar_select %p130, %s16, 1
        %s132 = smul.addr %s131, 2
        %s133 = smul.addr %s132, 8
        %s134 = scalar_lea.vmem %s0, %s133
        %p135 = pneg %p37
        %p136 = pneg %p34
        %p137 = scmp.lt.s32.totalorder %s16, 1
        %s138 = scalar_select %p137, %s16, 1
        %s139 = smul.addr %s138, 4
        %s140 = scalar_lea.vmem %s1, %s139
        %p141 = pneg %p63
        %p142 = pneg %p60
        %p143 = pneg %p89
        %p144 = pneg %p86
        %s145 = sand.u32 %s76, 1
        %s146 = scalar_lea.sflag [#allocation3], %s145
        %s147 = sand.u32 %s76, 1
        %s148 = smul.addr %s147, 16
        %s149 = scalar_lea.vmem [#allocation2], %s148
        %p150 = scmp.lt.s32.totalorder %s16, 1
        %s151 = scalar_select %p150, %s16, 1
        %s152 = smul.addr %s151, 2
        %s153 = smul.addr %s152, 8
        %s154 = scalar_lea.vmem %s0, %s153
        %p155 = scmp.lt.s32.totalorder %s16, 1
        %s156 = scalar_select %p155, %s16, 1
        %s157 = smul.addr %s156, 4
        %s158 = scalar_lea.vmem %s1, %s157
        %v159 = vld [vmem:[%s154] sm:$0xff]
        %v160 = vld [vmem:[%s154 + $0x8] sm:$0xff]
        %v161 = vld [vmem:[%s158] sm:$0x7]
        %v162 = vmul.f32 %v159, %v159
        %v163 = vmul.f32 %v160, %v160
        %vm164 = vcmask 23552
        %v165 = vsel %vm164, %v162, 0.0
        %166 = vadd.xlane.f32.xlu0 %v165
        %v167 = vpop.xlane.xlu0 %166
        %v168 = vsel %vm164, %v163, 0.0
        %169 = vadd.xlane.f32.xlu0 %v168
        %v170 = vpop.xlane.xlu0 %169
        %v171 = vmul.f32 %v161, %v161
        %vm172 = vcmask 518144
        %v173 = vsel %vm172, %v171, 0.0
        %v174 = vrot.slane %v173, 4
        %v175 = vadd.f32 %v173, %v174
        %v176 = vrot.slane %v175, 2
        %v177 = vadd.f32 %v175, %v176
        %v178 = vrot.slane %v177, 1
        %v179 = vadd.f32 %v177, %v178
        %v181 = vsel %vm164, %v159, 0
        %v184 = vsel %vm164, %v160, 0
        %vm186 = vcmask 1042432
        %v188 = vsel %vm186, %v161, 0
        %190 = vmatprep.subr.mxu0 0.0
        %191 = vmatpush1.msra.mxu0 0.0
        %192 = vmatprep.subr.mxu0 0.0
        %193 = vmatpush1.msra.mxu0 0.0
        %194 = vmatprep.subr.mxu0 0.0
        %195 = vmatpush1.msra.mxu0 0.0
        %196 = vmatprep.subr.mxu0 0.0
        %197 = vmatpush1.msra.mxu0 0.0
        %198 = vmatprep.subr.mxu0 0.0
        %199 = vmatpush1.msra.mxu0 0.0
        %200 = vmatprep.subr.mxu0 0.0
        %201 = vmatpush1.msra.mxu0 0.0
        %202 = vmatprep.subr.mxu0 0.0
        %203 = vmatpush1.msra.mxu0 0.0
        %204 = vmatprep.subr.mxu0 0.0
        %205 = vmatpush1.msra.mxu0 0.0
        %206 = vmatprep.subr.mxu0 0.0
        %207 = vmatpush1.msra.mxu0 0.0
        %208 = vmatprep.subr.mxu0 0.0
        %209 = vmatpush1.msra.mxu0 0.0
        %210 = vmatprep.subr.mxu0 0.0
        %211 = vmatpush1.msra.mxu0 0.0
        %212 = vmatprep.subr.mxu0 0.0
        %213 = vmatpush1.msra.mxu0 0.0
        %214 = vmatprep.subr.mxu0 0.0
        %215 = vmatpush1.msra.mxu0 0.0
        %216 = vmatprep.subr.mxu0 0.0
        %217 = vmatpush1.msra.mxu0 0.0
        %218 = vmatprep.subr.mxu0 0.0
        %219 = vmatpush1.msra.mxu0 0.0
        %220 = vmatprep.subr.mxu0 0.0
        %v221 = vand.u32 %v188, 4294901760
        %222 = vmatpush1.msra.mxu0 %v221
        %223 = vmatprep.subr.mxu0 0.0
        %224 = vmatpush2.msra.mxu0 0.0
        %225 = vmatprep.subr.mxu0 0.0
        %226 = vmatpush2.msra.mxu0 0.0
        %227 = vmatprep.subr.mxu0 0.0
        %228 = vmatpush2.msra.mxu0 0.0
        %229 = vmatprep.subr.mxu0 0.0
        %230 = vmatpush2.msra.mxu0 0.0
        %231 = vmatprep.subr.mxu0 0.0
        %232 = vmatpush2.msra.mxu0 0.0
        %233 = vmatprep.subr.mxu0 0.0
        %234 = vmatpush2.msra.mxu0 0.0
        %235 = vmatprep.subr.mxu0 0.0
        %236 = vmatpush2.msra.mxu0 0.0
        %237 = vmatprep.subr.mxu0 0.0
        %238 = vmatpush2.msra.mxu0 0.0
        %239 = vmatprep.subr.mxu0 0.0
        %240 = vmatpush2.msra.mxu0 0.0
        %241 = vmatprep.subr.mxu0 0.0
        %242 = vmatpush2.msra.mxu0 0.0
        %243 = vmatprep.subr.mxu0 0.0
        %244 = vmatpush2.msra.mxu0 0.0
        %245 = vmatprep.subr.mxu0 0.0
        %246 = vmatpush2.msra.mxu0 0.0
        %247 = vmatprep.subr.mxu0 0.0
        %248 = vmatpush2.msra.mxu0 0.0
        %249 = vmatprep.subr.mxu0 0.0
        %250 = vmatpush2.msra.mxu0 0.0
        %251 = vmatprep.subr.mxu0 0.0
        %252 = vmatpush2.msra.mxu0 0.0
        %253 = vmatprep.subr.mxu0 0.0
        %254 = vmatpush2.msra.mxu0 0.0
        %255 = vmatprep.mubr.f32.mxu0 0.0
        %v256 = vand.u32 %v181, 4294901760
        %v257 = vsub.f32 %v181, %v256
        %v258 = vand.u32 %v257, 4294901760
        %v259 = vsub.f32 %v257, %v258
        %v260 = vand.u32 %v259, 4294901760
        %261 = vmatmul.mubr.f32.gmra.mxu0 %v260
        %v262 = vpop.f32.mrf.mxu0
        %v263 = vadd.f32 0.0, %v262
        %v264 = vpop.f32.mrf.mxu0
        %265 = vmatprep.mubr.f32.mxu0 0.0
        %v266 = vand.u32 %v184, 4294901760
        %v267 = vsub.f32 %v184, %v266
        %v268 = vand.u32 %v267, 4294901760
        %v269 = vsub.f32 %v267, %v268
        %v270 = vand.u32 %v269, 4294901760
        %271 = vmatmul.mubr.f32.gmra.mxu0 %v270
        %v272 = vpop.f32.mrf.mxu0
        %v273 = vadd.f32 0.0, %v272
        %v274 = vpop.f32.mrf.mxu0
        %275 = vdwg.mxu0
        %276 = vmatprep.subr.mxu0 0.0
        %277 = vmatpush1.msra.mxu0 0.0
        %278 = vmatprep.subr.mxu0 0.0
        %279 = vmatpush1.msra.mxu0 0.0
        %280 = vmatprep.subr.mxu0 0.0
        %281 = vmatpush1.msra.mxu0 0.0
        %282 = vmatprep.subr.mxu0 0.0
        %283 = vmatpush1.msra.mxu0 0.0
        %284 = vmatprep.subr.mxu0 0.0
        %285 = vmatpush1.msra.mxu0 0.0
        %286 = vmatprep.subr.mxu0 0.0
        %287 = vmatpush1.msra.mxu0 0.0
        %288 = vmatprep.subr.mxu0 0.0
        %289 = vmatpush1.msra.mxu0 0.0
        %290 = vmatprep.subr.mxu0 0.0
        %291 = vmatpush1.msra.mxu0 0.0
        %292 = vmatprep.subr.mxu0 0.0
        %293 = vmatpush1.msra.mxu0 0.0
        %294 = vmatprep.subr.mxu0 0.0
        %295 = vmatpush1.msra.mxu0 0.0
        %296 = vmatprep.subr.mxu0 0.0
        %297 = vmatpush1.msra.mxu0 0.0
        %298 = vmatprep.subr.mxu0 0.0
        %299 = vmatpush1.msra.mxu0 0.0
        %300 = vmatprep.subr.mxu0 0.0
        %301 = vmatpush1.msra.mxu0 0.0
        %302 = vmatprep.subr.mxu0 0.0
        %303 = vmatpush1.msra.mxu0 0.0
        %304 = vmatprep.subr.mxu0 0.0
        %305 = vmatpush1.msra.mxu0 0.0
        %306 = vmatprep.subr.mxu0 0.0
        %v307 = vand.u32 %v188, 4294901760
        %v308 = vsub.f32 %v188, %v307
        %v309 = vand.u32 %v308, 4294901760
        %v310 = vsub.f32 %v308, %v309
        %v311 = vand.u32 %v310, 4294901760
        %312 = vmatpush1.msra.mxu0 %v311
        %313 = vmatprep.subr.mxu0 0.0
        %314 = vmatpush2.msra.mxu0 0.0
        %315 = vmatprep.subr.mxu0 0.0
        %316 = vmatpush2.msra.mxu0 0.0
        %317 = vmatprep.subr.mxu0 0.0
        %318 = vmatpush2.msra.mxu0 0.0
        %319 = vmatprep.subr.mxu0 0.0
        %320 = vmatpush2.msra.mxu0 0.0
        %321 = vmatprep.subr.mxu0 0.0
        %322 = vmatpush2.msra.mxu0 0.0
        %323 = vmatprep.subr.mxu0 0.0
        %324 = vmatpush2.msra.mxu0 0.0
        %325 = vmatprep.subr.mxu0 0.0
        %326 = vmatpush2.msra.mxu0 0.0
        %327 = vmatprep.subr.mxu0 0.0
        %328 = vmatpush2.msra.mxu0 0.0
        %329 = vmatprep.subr.mxu0 0.0
        %330 = vmatpush2.msra.mxu0 0.0
        %331 = vmatprep.subr.mxu0 0.0
        %332 = vmatpush2.msra.mxu0 0.0
        %333 = vmatprep.subr.mxu0 0.0
        %334 = vmatpush2.msra.mxu0 0.0
        %335 = vmatprep.subr.mxu0 0.0
        %336 = vmatpush2.msra.mxu0 0.0
        %337 = vmatprep.subr.mxu0 0.0
        %338 = vmatpush2.msra.mxu0 0.0
        %339 = vmatprep.subr.mxu0 0.0
        %340 = vmatpush2.msra.mxu0 0.0
        %341 = vmatprep.subr.mxu0 0.0
        %342 = vmatpush2.msra.mxu0 0.0
        %343 = vmatprep.subr.mxu0 0.0
        %344 = vmatpush2.msra.mxu0 0.0
        %345 = vmatprep.mubr.f32.mxu0 0.0
        %v346 = vand.u32 %v181, 4294901760
        %347 = vmatmul.mubr.f32.gmra.mxu0 %v346
        %v348 = vpop.f32.mrf.mxu0
        %v349 = vadd.f32 %v263, %v348
        %v350 = vpop.f32.mrf.mxu0
        %351 = vmatprep.mubr.f32.mxu0 0.0
        %v352 = vand.u32 %v184, 4294901760
        %353 = vmatmul.mubr.f32.gmra.mxu0 %v352
        %v354 = vpop.f32.mrf.mxu0
        %v355 = vadd.f32 %v273, %v354
        %v356 = vpop.f32.mrf.mxu0
        %357 = vdwg.mxu0
        %358 = vmatprep.subr.mxu0 0.0
        %359 = vmatpush1.msra.mxu0 0.0
        %360 = vmatprep.subr.mxu0 0.0
        %361 = vmatpush1.msra.mxu0 0.0
        %362 = vmatprep.subr.mxu0 0.0
        %363 = vmatpush1.msra.mxu0 0.0
        %364 = vmatprep.subr.mxu0 0.0
        %365 = vmatpush1.msra.mxu0 0.0
        %366 = vmatprep.subr.mxu0 0.0
        %367 = vmatpush1.msra.mxu0 0.0
        %368 = vmatprep.subr.mxu0 0.0
        %369 = vmatpush1.msra.mxu0 0.0
        %370 = vmatprep.subr.mxu0 0.0
        %371 = vmatpush1.msra.mxu0 0.0
        %372 = vmatprep.subr.mxu0 0.0
        %373 = vmatpush1.msra.mxu0 0.0
        %374 = vmatprep.subr.mxu0 0.0
        %375 = vmatpush1.msra.mxu0 0.0
        %376 = vmatprep.subr.mxu0 0.0
        %377 = vmatpush1.msra.mxu0 0.0
        %378 = vmatprep.subr.mxu0 0.0
        %379 = vmatpush1.msra.mxu0 0.0
        %380 = vmatprep.subr.mxu0 0.0
        %381 = vmatpush1.msra.mxu0 0.0
        %382 = vmatprep.subr.mxu0 0.0
        %383 = vmatpush1.msra.mxu0 0.0
        %384 = vmatprep.subr.mxu0 0.0
        %385 = vmatpush1.msra.mxu0 0.0
        %386 = vmatprep.subr.mxu0 0.0
        %387 = vmatpush1.msra.mxu0 0.0
        %388 = vmatprep.subr.mxu0 0.0
        %v389 = vand.u32 %v188, 4294901760
        %v390 = vsub.f32 %v188, %v389
        %391 = vmatpush1.msra.mxu0 %v390
        %392 = vmatprep.subr.mxu0 0.0
        %393 = vmatpush2.msra.mxu0 0.0
        %394 = vmatprep.subr.mxu0 0.0
        %395 = vmatpush2.msra.mxu0 0.0
        %396 = vmatprep.subr.mxu0 0.0
        %397 = vmatpush2.msra.mxu0 0.0
        %398 = vmatprep.subr.mxu0 0.0
        %399 = vmatpush2.msra.mxu0 0.0
        %400 = vmatprep.subr.mxu0 0.0
        %401 = vmatpush2.msra.mxu0 0.0
        %402 = vmatprep.subr.mxu0 0.0
        %403 = vmatpush2.msra.mxu0 0.0
        %404 = vmatprep.subr.mxu0 0.0
        %405 = vmatpush2.msra.mxu0 0.0
        %406 = vmatprep.subr.mxu0 0.0
        %407 = vmatpush2.msra.mxu0 0.0
        %408 = vmatprep.subr.mxu0 0.0
        %409 = vmatpush2.msra.mxu0 0.0
        %410 = vmatprep.subr.mxu0 0.0
        %411 = vmatpush2.msra.mxu0 0.0
        %412 = vmatprep.subr.mxu0 0.0
        %413 = vmatpush2.msra.mxu0 0.0
        %414 = vmatprep.subr.mxu0 0.0
        %415 = vmatpush2.msra.mxu0 0.0
        %416 = vmatprep.subr.mxu0 0.0
        %417 = vmatpush2.msra.mxu0 0.0
        %418 = vmatprep.subr.mxu0 0.0
        %419 = vmatpush2.msra.mxu0 0.0
        %420 = vmatprep.subr.mxu0 0.0
        %421 = vmatpush2.msra.mxu0 0.0
        %422 = vmatprep.subr.mxu0 0.0
        %423 = vmatpush2.msra.mxu0 0.0
        %424 = vmatprep.mubr.f32.mxu0 0.0
        %v425 = vand.u32 %v181, 4294901760
        %v426 = vsub.f32 %v181, %v425
        %427 = vmatmul.mubr.f32.gmra.mxu0 %v426
        %v428 = vpop.f32.mrf.mxu0
        %v429 = vadd.f32 %v349, %v428
        %v430 = vpop.f32.mrf.mxu0
        %431 = vmatprep.mubr.f32.mxu0 0.0
        %v432 = vand.u32 %v184, 4294901760
        %v433 = vsub.f32 %v184, %v432
        %434 = vmatmul.mubr.f32.gmra.mxu0 %v433
        %v435 = vpop.f32.mrf.mxu0
        %v436 = vadd.f32 %v355, %v435
        %v437 = vpop.f32.mrf.mxu0
        %438 = vdwg.mxu0
        %439 = vmatprep.subr.mxu0 0.0
        %440 = vmatpush1.msra.mxu0 0.0
        %441 = vmatprep.subr.mxu0 0.0
        %442 = vmatpush1.msra.mxu0 0.0
        %443 = vmatprep.subr.mxu0 0.0
        %444 = vmatpush1.msra.mxu0 0.0
        %445 = vmatprep.subr.mxu0 0.0
        %446 = vmatpush1.msra.mxu0 0.0
        %447 = vmatprep.subr.mxu0 0.0
        %448 = vmatpush1.msra.mxu0 0.0
        %449 = vmatprep.subr.mxu0 0.0
        %450 = vmatpush1.msra.mxu0 0.0
        %451 = vmatprep.subr.mxu0 0.0
        %452 = vmatpush1.msra.mxu0 0.0
        %453 = vmatprep.subr.mxu0 0.0
        %454 = vmatpush1.msra.mxu0 0.0
        %455 = vmatprep.subr.mxu0 0.0
        %456 = vmatpush1.msra.mxu0 0.0
        %457 = vmatprep.subr.mxu0 0.0
        %458 = vmatpush1.msra.mxu0 0.0
        %459 = vmatprep.subr.mxu0 0.0
        %460 = vmatpush1.msra.mxu0 0.0
        %461 = vmatprep.subr.mxu0 0.0
        %462 = vmatpush1.msra.mxu0 0.0
        %463 = vmatprep.subr.mxu0 0.0
        %464 = vmatpush1.msra.mxu0 0.0
        %465 = vmatprep.subr.mxu0 0.0
        %466 = vmatpush1.msra.mxu0 0.0
        %467 = vmatprep.subr.mxu0 0.0
        %468 = vmatpush1.msra.mxu0 0.0
        %469 = vmatprep.subr.mxu0 0.0
        %v470 = vand.u32 %v188, 4294901760
        %471 = vmatpush1.msra.mxu0 %v470
        %472 = vmatprep.subr.mxu0 0.0
        %473 = vmatpush2.msra.mxu0 0.0
        %474 = vmatprep.subr.mxu0 0.0
        %475 = vmatpush2.msra.mxu0 0.0
        %476 = vmatprep.subr.mxu0 0.0
        %477 = vmatpush2.msra.mxu0 0.0
        %478 = vmatprep.subr.mxu0 0.0
        %479 = vmatpush2.msra.mxu0 0.0
        %480 = vmatprep.subr.mxu0 0.0
        %481 = vmatpush2.msra.mxu0 0.0
        %482 = vmatprep.subr.mxu0 0.0
        %483 = vmatpush2.msra.mxu0 0.0
        %484 = vmatprep.subr.mxu0 0.0
        %485 = vmatpush2.msra.mxu0 0.0
        %486 = vmatprep.subr.mxu0 0.0
        %487 = vmatpush2.msra.mxu0 0.0
        %488 = vmatprep.subr.mxu0 0.0
        %489 = vmatpush2.msra.mxu0 0.0
        %490 = vmatprep.subr.mxu0 0.0
        %491 = vmatpush2.msra.mxu0 0.0
        %492 = vmatprep.subr.mxu0 0.0
        %493 = vmatpush2.msra.mxu0 0.0
        %494 = vmatprep.subr.mxu0 0.0
        %495 = vmatpush2.msra.mxu0 0.0
        %496 = vmatprep.subr.mxu0 0.0
        %497 = vmatpush2.msra.mxu0 0.0
        %498 = vmatprep.subr.mxu0 0.0
        %499 = vmatpush2.msra.mxu0 0.0
        %500 = vmatprep.subr.mxu0 0.0
        %501 = vmatpush2.msra.mxu0 0.0
        %502 = vmatprep.subr.mxu0 0.0
        %503 = vmatpush2.msra.mxu0 0.0
        %504 = vmatprep.mubr.f32.mxu0 0.0
        %v505 = vand.u32 %v181, 4294901760
        %v506 = vsub.f32 %v181, %v505
        %v507 = vand.u32 %v506, 4294901760
        %508 = vmatmul.mubr.f32.gmra.mxu0 %v507
        %v509 = vpop.f32.mrf.mxu0
        %v510 = vadd.f32 %v429, %v509
        %v511 = vpop.f32.mrf.mxu0
        %512 = vmatprep.mubr.f32.mxu0 0.0
        %v513 = vand.u32 %v184, 4294901760
        %v514 = vsub.f32 %v184, %v513
        %v515 = vand.u32 %v514, 4294901760
        %516 = vmatmul.mubr.f32.gmra.mxu0 %v515
        %v517 = vpop.f32.mrf.mxu0
        %v518 = vadd.f32 %v436, %v517
        %v519 = vpop.f32.mrf.mxu0
        %520 = vdwg.mxu0
        %521 = vmatprep.subr.mxu0 0.0
        %522 = vmatpush1.msra.mxu0 0.0
        %523 = vmatprep.subr.mxu0 0.0
        %524 = vmatpush1.msra.mxu0 0.0
        %525 = vmatprep.subr.mxu0 0.0
        %526 = vmatpush1.msra.mxu0 0.0
        %527 = vmatprep.subr.mxu0 0.0
        %528 = vmatpush1.msra.mxu0 0.0
        %529 = vmatprep.subr.mxu0 0.0
        %530 = vmatpush1.msra.mxu0 0.0
        %531 = vmatprep.subr.mxu0 0.0
        %532 = vmatpush1.msra.mxu0 0.0
        %533 = vmatprep.subr.mxu0 0.0
        %534 = vmatpush1.msra.mxu0 0.0
        %535 = vmatprep.subr.mxu0 0.0
        %536 = vmatpush1.msra.mxu0 0.0
        %537 = vmatprep.subr.mxu0 0.0
        %538 = vmatpush1.msra.mxu0 0.0
        %539 = vmatprep.subr.mxu0 0.0
        %540 = vmatpush1.msra.mxu0 0.0
        %541 = vmatprep.subr.mxu0 0.0
        %542 = vmatpush1.msra.mxu0 0.0
        %543 = vmatprep.subr.mxu0 0.0
        %544 = vmatpush1.msra.mxu0 0.0
        %545 = vmatprep.subr.mxu0 0.0
        %546 = vmatpush1.msra.mxu0 0.0
        %547 = vmatprep.subr.mxu0 0.0
        %548 = vmatpush1.msra.mxu0 0.0
        %549 = vmatprep.subr.mxu0 0.0
        %550 = vmatpush1.msra.mxu0 0.0
        %551 = vmatprep.subr.mxu0 0.0
        %v552 = vand.u32 %v188, 4294901760
        %v553 = vsub.f32 %v188, %v552
        %v554 = vand.u32 %v553, 4294901760
        %555 = vmatpush1.msra.mxu0 %v554
        %556 = vmatprep.subr.mxu0 0.0
        %557 = vmatpush2.msra.mxu0 0.0
        %558 = vmatprep.subr.mxu0 0.0
        %559 = vmatpush2.msra.mxu0 0.0
        %560 = vmatprep.subr.mxu0 0.0
        %561 = vmatpush2.msra.mxu0 0.0
        %562 = vmatprep.subr.mxu0 0.0
        %563 = vmatpush2.msra.mxu0 0.0
        %564 = vmatprep.subr.mxu0 0.0
        %565 = vmatpush2.msra.mxu0 0.0
        %566 = vmatprep.subr.mxu0 0.0
        %567 = vmatpush2.msra.mxu0 0.0
        %568 = vmatprep.subr.mxu0 0.0
        %569 = vmatpush2.msra.mxu0 0.0
        %570 = vmatprep.subr.mxu0 0.0
        %571 = vmatpush2.msra.mxu0 0.0
        %572 = vmatprep.subr.mxu0 0.0
        %573 = vmatpush2.msra.mxu0 0.0
        %574 = vmatprep.subr.mxu0 0.0
        %575 = vmatpush2.msra.mxu0 0.0
        %576 = vmatprep.subr.mxu0 0.0
        %577 = vmatpush2.msra.mxu0 0.0
        %578 = vmatprep.subr.mxu0 0.0
        %579 = vmatpush2.msra.mxu0 0.0
        %580 = vmatprep.subr.mxu0 0.0
        %581 = vmatpush2.msra.mxu0 0.0
        %582 = vmatprep.subr.mxu0 0.0
        %583 = vmatpush2.msra.mxu0 0.0
        %584 = vmatprep.subr.mxu0 0.0
        %585 = vmatpush2.msra.mxu0 0.0
        %586 = vmatprep.subr.mxu0 0.0
        %587 = vmatpush2.msra.mxu0 0.0
        %588 = vmatprep.mubr.f32.mxu0 0.0
        %v589 = vand.u32 %v181, 4294901760
        %590 = vmatmul.mubr.f32.gmra.mxu0 %v589
        %v591 = vpop.f32.mrf.mxu0
        %v592 = vadd.f32 %v510, %v591
        %v593 = vpop.f32.mrf.mxu0
        %594 = vmatprep.mubr.f32.mxu0 0.0
        %v595 = vand.u32 %v184, 4294901760
        %596 = vmatmul.mubr.f32.gmra.mxu0 %v595
        %v597 = vpop.f32.mrf.mxu0
        %v598 = vadd.f32 %v518, %v597
        %v599 = vpop.f32.mrf.mxu0
        %600 = vdwg.mxu0
        %601 = vmatprep.subr.mxu0 0.0
        %602 = vmatpush1.msra.mxu0 0.0
        %603 = vmatprep.subr.mxu0 0.0
        %604 = vmatpush1.msra.mxu0 0.0
        %605 = vmatprep.subr.mxu0 0.0
        %606 = vmatpush1.msra.mxu0 0.0
        %607 = vmatprep.subr.mxu0 0.0
        %608 = vmatpush1.msra.mxu0 0.0
        %609 = vmatprep.subr.mxu0 0.0
        %610 = vmatpush1.msra.mxu0 0.0
        %611 = vmatprep.subr.mxu0 0.0
        %612 = vmatpush1.msra.mxu0 0.0
        %613 = vmatprep.subr.mxu0 0.0
        %614 = vmatpush1.msra.mxu0 0.0
        %615 = vmatprep.subr.mxu0 0.0
        %616 = vmatpush1.msra.mxu0 0.0
        %617 = vmatprep.subr.mxu0 0.0
        %618 = vmatpush1.msra.mxu0 0.0
        %619 = vmatprep.subr.mxu0 0.0
        %620 = vmatpush1.msra.mxu0 0.0
        %621 = vmatprep.subr.mxu0 0.0
        %622 = vmatpush1.msra.mxu0 0.0
        %623 = vmatprep.subr.mxu0 0.0
        %624 = vmatpush1.msra.mxu0 0.0
        %625 = vmatprep.subr.mxu0 0.0
        %626 = vmatpush1.msra.mxu0 0.0
        %627 = vmatprep.subr.mxu0 0.0
        %628 = vmatpush1.msra.mxu0 0.0
        %629 = vmatprep.subr.mxu0 0.0
        %630 = vmatpush1.msra.mxu0 0.0
        %631 = vmatprep.subr.mxu0 0.0
        %v632 = vand.u32 %v188, 4294901760
        %633 = vmatpush1.msra.mxu0 %v632
        %634 = vmatprep.subr.mxu0 0.0
        %635 = vmatpush2.msra.mxu0 0.0
        %636 = vmatprep.subr.mxu0 0.0
        %637 = vmatpush2.msra.mxu0 0.0
        %638 = vmatprep.subr.mxu0 0.0
        %639 = vmatpush2.msra.mxu0 0.0
        %640 = vmatprep.subr.mxu0 0.0
        %641 = vmatpush2.msra.mxu0 0.0
        %642 = vmatprep.subr.mxu0 0.0
        %643 = vmatpush2.msra.mxu0 0.0
        %644 = vmatprep.subr.mxu0 0.0
        %645 = vmatpush2.msra.mxu0 0.0
        %646 = vmatprep.subr.mxu0 0.0
        %647 = vmatpush2.msra.mxu0 0.0
        %648 = vmatprep.subr.mxu0 0.0
        %649 = vmatpush2.msra.mxu0 0.0
        %650 = vmatprep.subr.mxu0 0.0
        %651 = vmatpush2.msra.mxu0 0.0
        %652 = vmatprep.subr.mxu0 0.0
        %653 = vmatpush2.msra.mxu0 0.0
        %654 = vmatprep.subr.mxu0 0.0
        %655 = vmatpush2.msra.mxu0 0.0
        %656 = vmatprep.subr.mxu0 0.0
        %657 = vmatpush2.msra.mxu0 0.0
        %658 = vmatprep.subr.mxu0 0.0
        %659 = vmatpush2.msra.mxu0 0.0
        %660 = vmatprep.subr.mxu0 0.0
        %661 = vmatpush2.msra.mxu0 0.0
        %662 = vmatprep.subr.mxu0 0.0
        %663 = vmatpush2.msra.mxu0 0.0
        %664 = vmatprep.subr.mxu0 0.0
        %665 = vmatpush2.msra.mxu0 0.0
        %666 = vmatprep.mubr.f32.mxu0 0.0
        %v667 = vand.u32 %v181, 4294901760
        %668 = vmatmul.mubr.f32.gmra.mxu0 %v667
        %v669 = vpop.f32.mrf.mxu0
        %v670 = vadd.f32 %v592, %v669
        %v671 = vpop.f32.mrf.mxu0
        %672 = vmatprep.mubr.f32.mxu0 0.0
        %v673 = vand.u32 %v184, 4294901760
        %674 = vmatmul.mubr.f32.gmra.mxu0 %v673
        %v675 = vpop.f32.mrf.mxu0
        %v676 = vadd.f32 %v598, %v675
        %v677 = vpop.f32.mrf.mxu0
        %678 = vdwg.mxu0
        %v679 = vmul.f32 %v670, 2.0
        %v680 = vmul.f32 %v676, 2.0
        %v681 = vsub.f32 %v167, %v679
        %v682 = vsub.f32 %v170, %v680
        %v683 = vadd.f32 %v681, %v179
        %v684 = vadd.f32 %v682, %v179
        %vm685 = vcmask 523264
        %686 = vst.msk [vmem:[%s149] sm:$0xff] %vm685, %v683
        %687 = vst.msk [vmem:[%s149 + $0x8] sm:$0xff] %vm685, %v684
        %s688 = sand.u32 %s76, 1
        %s689 = scalar_lea.sflag [#allocation3], %s688
        %s690 = sand.u32 %s76, 1
        %s691 = smul.addr %s690, 16
        %s692 = scalar_lea.vmem [#allocation2], %s691
        // Predicated region
        $region29: #{tpu_custom_call.1} parent=27 // pred_check
          %p693 = pneg %p86
        $region30: #{tpu_custom_call.1} parent=27 // pred_check_branch
          %695 = sbr.rel (%p693) target = $region32
        $region31: #{tpu_custom_call.1} parent=27 // pred_region
          %s697 = ssub.s32 256, 256
          %698 = vsyncadd %s689, %s697
          %s699 = smul.addr %s16, 2
          %s700 = smul.addr %s699, 128
          %s701 = scalar_lea.hbm %s2, %s700
          %s702 = sshll.u32 %s692, 4
          %s703 = int_to_ptr.vmem [resolvable:$true] %s702
          %708 = dma.vmem_to_hbm [thread:$0]  %s703, 256, %s701, %s689, 128, 128, 8
        $region32: #{tpu_custom_call.1} parent=27 // pred_fallthru
          _
      $region28: #{tpu_custom_call.1} parent=5 // pred_fallthru
        _
      %p709 = scmp.le.s32.totalorder 2, %s11
      // Predicated region
      $region33: #{tpu_custom_call.1} parent=5 // pred_check
        %p710 = pneg %p709
      $region34: #{tpu_custom_call.1} parent=5 // pred_check_branch
        %712 = sbr.rel (%p710) target = $region36
      $region35: #{tpu_custom_call.1} parent=5 // pred_region
        %s713 = ssub.s32 %s11, 2
        // Predicated region
        $region37: #{tpu_custom_call.1} parent=35 // pred_check
          %p714 = pneg %p92
        $region38: #{tpu_custom_call.1} parent=35 // pred_check_branch
          %716 = sbr.rel (%p714) target = $region40
        $region39: #{tpu_custom_call.1} parent=35 // pred_region
          %s717 = sand.u32 %s77, 1
          %s718 = scalar_lea.sflag [#allocation3], %s717
          %s719 = sand.u32 %s77, 1
          %s720 = smul.addr %s719, 16
          %s721 = scalar_lea.vmem [#allocation2], %s720
          %722 = dma.done %s718, 256
        $region40: #{tpu_custom_call.1} parent=35 // pred_fallthru
          _
      $region36: #{tpu_custom_call.1} parent=5 // pred_fallthru
        _
    $region6: #{tpu_custom_call.1} parent=1 // loop_footer
      %s15 = sadd.s32 1, %s11
    $region7: #{tpu_custom_call.1} parent=1 // loop_footer_branch
      %10 = sbr.rel target = $region3
    $region8: #{tpu_custom_call.1} parent=1 // loop_exit
      _
    %723 = vsyncpa [#allocation3], 1
    %s724 = scalar_lea.sflag [#allocation3], 1
    %725 = vsyncpa %s724, 1

</llo_original>
